<compile_context>
chip_gen: v5e
topology: v5e:2x2
jax: 0.10.0
libtpu: 0.0.40
codegen_flags: <defaults>
</compile_context>

<pallas_src>
import functools

import jax
import jax.numpy as jnp
from jax.experimental import pallas as pl
from jax.experimental.pallas import tpu as pltpu

EMBEDDING_DIM = 16
HIDDEN_UNITS = 32
NUM_CONTEXT_FEATURES = 8


def ncf_kernel(ue_ref, ie_ref, ctx_ref,          # streamed, batch-on-lane, bf16
               ctxw_ref, ctxb_ref,               # resident weights
               w1_ref, b1_ref, w2_ref, b2_ref,
               out_ref):
    # context_embedding = Linear(ctx):  Wc^T @ ctx^T + bc   -> (16, TB) f32
    ctx_emb = jnp.dot(ctxw_ref[...], ctx_ref[...],
                      preferred_element_type=jnp.float32) + ctxb_ref[...]

    # concat([user, item, ctx], feature axis) is a sublane concat in this layout;
    # MLP layer 1 becomes a single K=48 MXU matmul:  W1^T @ x^T + b1 -> (32, TB)
    x_t = jnp.concatenate(
        [ue_ref[...], ie_ref[...], ctx_emb.astype(jnp.bfloat16)], axis=0)  # (48, TB)

    h = jnp.dot(w1_ref[...], x_t, preferred_element_type=jnp.float32) + b1_ref[...]
    h = jnp.maximum(h, 0.0)        # ReLU; Dropout layers are identity in eval mode

    # Final Linear(32 -> 1): VPU multiply + sublane reduce instead of an N=1 matmul.
    out_ref[...] = jnp.sum(h * w2_ref[...], axis=0, keepdims=True) + b2_ref[...]


def ncf_with_context(users, items, ctx, params, *, tb=512):
    B = users.shape[0]
    n_ctx = ctx.shape[1]
    users = users.astype(jnp.int32)
    items = items.astype(jnp.int32)

    # Embedding gather hoisted to XLA: keeps vocab-sized tables out of VMEM and
    # turns an O(B*vocab) one-hot matmul into an O(B*16) row gather.
    ue = jnp.take(params["user_tbl"], users, axis=0)      # (B, 16) bf16
    ie = jnp.take(params["item_tbl"], items, axis=0)      # (B, 16) bf16

    # Batch-on-lane layout: transpose so batch maps to the 128-lane axis, pad batch
    # up to a multiple of the tile size.
    b_pad = pl.cdiv(B, tb) * tb

    def to_lanes(x):                                      # (B, F) -> (F, b_pad)
        xt = jnp.transpose(x)
        return jnp.pad(xt, ((0, 0), (0, b_pad - B)))

    ue_t = to_lanes(ue)                                   # (16, b_pad) bf16
    ie_t = to_lanes(ie)                                   # (16, b_pad) bf16
    ctx_t = to_lanes(ctx.astype(jnp.bfloat16))            # (8,  b_pad) bf16

    grid = (b_pad // tb,)

    def batch_spec(f):
        return pl.BlockSpec((f, tb), lambda i: (0, i))

    def const_spec(shape):
        return pl.BlockSpec(shape, lambda i: (0, 0))

    flops = 2 * B * (n_ctx * EMBEDDING_DIM
                     + 3 * EMBEDDING_DIM * HIDDEN_UNITS
                     + HIDDEN_UNITS)
    bytes_accessed = (B * (2 * EMBEDDING_DIM + n_ctx) * 2      # bf16 activations in
                      + B * 4                                   # f32 out
                      + (EMBEDDING_DIM * n_ctx
                         + 3 * EMBEDDING_DIM * HIDDEN_UNITS) * 2   # bf16 weights
                      + (EMBEDDING_DIM + 2 * HIDDEN_UNITS + 1) * 4)  # f32 biases/w2

    out = pl.pallas_call(
        ncf_kernel,
        out_shape=jax.ShapeDtypeStruct((1, b_pad), jnp.float32),
        grid_spec=pltpu.PrefetchScalarGridSpec(
            num_scalar_prefetch=0,
            grid=grid,
            in_specs=[
                batch_spec(EMBEDDING_DIM),                     # ue_t  (16, tb)
                batch_spec(EMBEDDING_DIM),                     # ie_t  (16, tb)
                batch_spec(n_ctx),                             # ctx_t (8, tb)
                const_spec((EMBEDDING_DIM, n_ctx)),            # Wc^T  (16, 8)
                const_spec((EMBEDDING_DIM, 1)),                # bc    (16, 1)
                const_spec((HIDDEN_UNITS, 3 * EMBEDDING_DIM)),  # W1^T (32, 48)
                const_spec((HIDDEN_UNITS, 1)),                 # b1    (32, 1)
                const_spec((HIDDEN_UNITS, 1)),                 # W2    (32, 1)
                const_spec((1, 1)),                            # b2    (1, 1)
            ],
            out_specs=pl.BlockSpec((1, tb), lambda i: (0, i)),
        ),
        compiler_params=pltpu.CompilerParams(
            dimension_semantics=("parallel",)),
        cost_estimate=pl.CostEstimate(
            flops=flops, transcendentals=0, bytes_accessed=bytes_accessed),
    )(ue_t, ie_t, ctx_t,
      params["ctx_w_t"], params["ctx_b"],
      params["w1_t"], params["b1"], params["w2"], params["b2"])

    return out[0, :B]                                      # .squeeze()


def init_params(key, num_users, num_items):
    ks = jax.random.split(key, 8)
    ctx_w = jax.random.normal(ks[2], (NUM_CONTEXT_FEATURES, EMBEDDING_DIM), jnp.float32) * 0.2
    w1 = jax.random.normal(ks[4], (3 * EMBEDDING_DIM, HIDDEN_UNITS), jnp.float32) * 0.2
    return {
        # bf16 storage for the streamed tensors / matmul weights (halves DMA traffic)
        "user_tbl": (jax.random.normal(ks[0], (num_users, EMBEDDING_DIM), jnp.float32) * 0.1
                     ).astype(jnp.bfloat16),
        "item_tbl": (jax.random.normal(ks[1], (num_items, EMBEDDING_DIM), jnp.float32) * 0.1
                     ).astype(jnp.bfloat16),
        "ctx_w_t": ctx_w.T.astype(jnp.bfloat16),                       # (16, 8)
        "ctx_b": jax.random.normal(ks[3], (EMBEDDING_DIM, 1), jnp.float32) * 0.05,
        "w1_t": w1.T.astype(jnp.bfloat16),                             # (32, 48)
        "b1": jax.random.normal(ks[5], (HIDDEN_UNITS, 1), jnp.float32) * 0.05,
        "w2": jax.random.normal(ks[6], (HIDDEN_UNITS, 1), jnp.float32) * 0.2,
        "b2": jax.random.normal(ks[7], (1, 1), jnp.float32) * 0.05,
    }


def reference_forward(users, items, ctx, p):
    # Pure-JAX f32 reference using the same stored (bf16) parameter values.
    ue = p["user_tbl"].astype(jnp.float32)[users]
    ie = p["item_tbl"].astype(jnp.float32)[items]
    ce = ctx @ p["ctx_w_t"].astype(jnp.float32).T + p["ctx_b"][:, 0]
    x = jnp.concatenate([ue, ie, ce], axis=1)
    h = jnp.maximum(x @ p["w1_t"].astype(jnp.float32).T + p["b1"][:, 0], 0.0)
    return h @ p["w2"][:, 0] + p["b2"][0, 0]


if __name__ == "__main__":
    B = 1000
    NUM_USERS = 200
    NUM_ITEMS = 100

    key = jax.random.PRNGKey(0)
    k_u, k_i, k_c, k_p = jax.random.split(key, 4)

    users = jax.random.randint(k_u, (B,), 0, NUM_USERS, dtype=jnp.int32)
    items = jax.random.randint(k_i, (B,), 0, NUM_ITEMS, dtype=jnp.int32)
    context_features = jax.random.normal(k_c, (B, NUM_CONTEXT_FEATURES), jnp.float32)

    params = init_params(k_p, NUM_USERS, NUM_ITEMS)

    fwd = jax.jit(functools.partial(ncf_with_context, tb=512))
    out = fwd(users, items, context_features, params)
    out = jax.block_until_ready(out)

    ref = reference_forward(users, items, context_features, params)
    assert out.shape == (B,), out.shape
    max_err = float(jnp.max(jnp.abs(out - ref)))
    # bf16 activation/weight path vs f32 reference -> loosened tolerance.
    assert jnp.allclose(out, ref, atol=3e-2, rtol=3e-2), ("max_abs_err", max_err)

    print("KERNEL_OK")
</pallas_src>

<mosaic_0001>
module attributes {stable_mosaic.version = 11 : i64} {
  func.func @ncf_kernel(%arg0: i32, %arg1: memref<16x512xbf16, #tpu.memory_space<vmem>>, %arg2: memref<16x512xbf16, #tpu.memory_space<vmem>>, %arg3: memref<8x512xbf16, #tpu.memory_space<vmem>>, %arg4: memref<16x8xbf16, #tpu.memory_space<vmem>>, %arg5: memref<16x1xf32, #tpu.memory_space<vmem>>, %arg6: memref<32x48xbf16, #tpu.memory_space<vmem>>, %arg7: memref<32x1xf32, #tpu.memory_space<vmem>>, %arg8: memref<32x1xf32, #tpu.memory_space<vmem>>, %arg9: memref<1x1xf32, #tpu.memory_space<vmem>>, %arg10: memref<1x512xf32, #tpu.memory_space<vmem>>) attributes {dimension_semantics = [#tpu.dimension_semantics<parallel>], iteration_bounds = array<i64: 2>, scalar_prefetch = 0 : i64, scratch_operands = 0 : i64, tpu.core_type = #tpu.core_type<tc>, window_params = [{transform_indices = @transform_0, window_bounds = array<i64: 16, 512>}, {transform_indices = @transform_1, window_bounds = array<i64: 16, 512>}, {transform_indices = @transform_2, window_bounds = array<i64: 8, 512>}, {pipeline_mode = #tpu.pipeline_mode<synchronous>, transform_indices = @transform_3, window_bounds = array<i64: 16, 8>}, {pipeline_mode = #tpu.pipeline_mode<synchronous>, transform_indices = @transform_4, window_bounds = array<i64: 16, 1>}, {pipeline_mode = #tpu.pipeline_mode<synchronous>, transform_indices = @transform_5, window_bounds = array<i64: 32, 48>}, {pipeline_mode = #tpu.pipeline_mode<synchronous>, transform_indices = @transform_6, window_bounds = array<i64: 32, 1>}, {pipeline_mode = #tpu.pipeline_mode<synchronous>, transform_indices = @transform_7, window_bounds = array<i64: 32, 1>}, {pipeline_mode = #tpu.pipeline_mode<synchronous>, transform_indices = @transform_8, window_bounds = array<i64: 1, 1>}, {transform_indices = @transform_9, window_bounds = array<i64: 1, 512>}]} {
    %c0 = arith.constant 0 : index
    %c0_0 = arith.constant 0 : index
    %0 = vector.load %arg4[%c0, %c0_0] : memref<16x8xbf16, #tpu.memory_space<vmem>>, vector<16x8xbf16>
    %c0_1 = arith.constant 0 : index
    %c0_2 = arith.constant 0 : index
    %1 = vector.load %arg3[%c0_1, %c0_2] : memref<8x512xbf16, #tpu.memory_space<vmem>>, vector<8x512xbf16>
    %cst = arith.constant dense<0.000000e+00> : vector<16x512xf32>
    %2 = tpu.matmul %0, %1, %cst {dimension_numbers = #tpu.dot_dimension_numbers<[1], [0], [0], [1], [0, 0, 1, 1], [], []>} : vector<16x8xbf16>, vector<8x512xbf16>, vector<16x512xf32> -> vector<16x512xf32>
    %c0_3 = arith.constant 0 : index
    %c0_4 = arith.constant 0 : index
    %3 = vector.load %arg5[%c0_3, %c0_4] : memref<16x1xf32, #tpu.memory_space<vmem>>, vector<16x1xf32>
    %4 = vector.broadcast %3 : vector<16x1xf32> to vector<16x512xf32>
    %5 = arith.addf %2, %4 : vector<16x512xf32>
    %c0_5 = arith.constant 0 : index
    %c0_6 = arith.constant 0 : index
    %6 = vector.load %arg1[%c0_5, %c0_6] : memref<16x512xbf16, #tpu.memory_space<vmem>>, vector<16x512xbf16>
    %c0_7 = arith.constant 0 : index
    %c0_8 = arith.constant 0 : index
    %7 = vector.load %arg2[%c0_7, %c0_8] : memref<16x512xbf16, #tpu.memory_space<vmem>>, vector<16x512xbf16>
    %8 = arith.truncf %5 : vector<16x512xf32> to vector<16x512xbf16>
    %9 = tpu.concatenate %6, %7, %8 in 0 : vector<16x512xbf16>, vector<16x512xbf16>, vector<16x512xbf16> -> vector<48x512xbf16>
    %c0_9 = arith.constant 0 : index
    %c0_10 = arith.constant 0 : index
    %10 = vector.load %arg6[%c0_9, %c0_10] : memref<32x48xbf16, #tpu.memory_space<vmem>>, vector<32x48xbf16>
    %cst_11 = arith.constant dense<0.000000e+00> : vector<32x512xf32>
    %11 = tpu.matmul %10, %9, %cst_11 {dimension_numbers = #tpu.dot_dimension_numbers<[1], [0], [0], [1], [0, 0, 1, 1], [], []>} : vector<32x48xbf16>, vector<48x512xbf16>, vector<32x512xf32> -> vector<32x512xf32>
    %c0_12 = arith.constant 0 : index
    %c0_13 = arith.constant 0 : index
    %12 = vector.load %arg7[%c0_12, %c0_13] : memref<32x1xf32, #tpu.memory_space<vmem>>, vector<32x1xf32>
    %13 = vector.broadcast %12 : vector<32x1xf32> to vector<32x512xf32>
    %14 = arith.addf %11, %13 : vector<32x512xf32>
    %cst_14 = arith.constant 0.000000e+00 : f32
    %15 = vector.broadcast %cst_14 : f32 to vector<32x512xf32>
    %16 = arith.maximumf %14, %15 : vector<32x512xf32>
    %c0_15 = arith.constant 0 : index
    %c0_16 = arith.constant 0 : index
    %17 = vector.load %arg8[%c0_15, %c0_16] : memref<32x1xf32, #tpu.memory_space<vmem>>, vector<32x1xf32>
    %18 = vector.broadcast %17 : vector<32x1xf32> to vector<32x512xf32>
    %19 = arith.mulf %16, %18 : vector<32x512xf32>
    %cst_17 = arith.constant dense<0.000000e+00> : vector<512xf32>
    %20 = vector.multi_reduction <add>, %19, %cst_17 [0] : vector<32x512xf32> to vector<512xf32>
    %21 = vector.shape_cast %20 : vector<512xf32> to vector<1x512xf32>
    %c0_18 = arith.constant 0 : index
    %c0_19 = arith.constant 0 : index
    %22 = vector.load %arg9[%c0_18, %c0_19] : memref<1x1xf32, #tpu.memory_space<vmem>>, vector<1x1xf32>
    %23 = vector.broadcast %22 : vector<1x1xf32> to vector<1x512xf32>
    %24 = arith.addf %21, %23 : vector<1x512xf32>
    %c0_20 = arith.constant 0 : index
    %c0_21 = arith.constant 0 : index
    %25 = vector.load %arg10[%c0_20, %c0_21] : memref<1x512xf32, #tpu.memory_space<vmem>>, vector<1x512xf32>
    tpu.vector_store %arg10[%c0_20, %c0_21], %24 {strides = array<i32>} : memref<1x512xf32, #tpu.memory_space<vmem>>, vector<1x512xf32>,
    return
  }
  func.func @transform_0(%arg0: i32) -> (i32, i32) {
    %c0_i32 = arith.constant 0 : i32
    %c0_i32_0 = arith.constant 0 : i32
    return %c0_i32, %arg0 : i32, i32
  }
  func.func @transform_1(%arg0: i32) -> (i32, i32) {
    %c0_i32 = arith.constant 0 : i32
    %c0_i32_0 = arith.constant 0 : i32
    return %c0_i32, %arg0 : i32, i32
  }
  func.func @transform_2(%arg0: i32) -> (i32, i32) {
    %c0_i32 = arith.constant 0 : i32
    %c0_i32_0 = arith.constant 0 : i32
    return %c0_i32, %arg0 : i32, i32
  }
  func.func @transform_3(%arg0: i32) -> (i32, i32) {
    %c0_i32 = arith.constant 0 : i32
    %c0_i32_0 = arith.constant 0 : i32
    %c0_i32_1 = arith.constant 0 : i32
    return %c0_i32, %c0_i32_0 : i32, i32
  }
  func.func @transform_4(%arg0: i32) -> (i32, i32) {
    %c0_i32 = arith.constant 0 : i32
    %c0_i32_0 = arith.constant 0 : i32
    %c0_i32_1 = arith.constant 0 : i32
    return %c0_i32, %c0_i32_0 : i32, i32
  }
  func.func @transform_5(%arg0: i32) -> (i32, i32) {
    %c0_i32 = arith.constant 0 : i32
    %c0_i32_0 = arith.constant 0 : i32
    %c0_i32_1 = arith.constant 0 : i32
    return %c0_i32, %c0_i32_0 : i32, i32
  }
  func.func @transform_6(%arg0: i32) -> (i32, i32) {
    %c0_i32 = arith.constant 0 : i32
    %c0_i32_0 = arith.constant 0 : i32
    %c0_i32_1 = arith.constant 0 : i32
    return %c0_i32, %c0_i32_0 : i32, i32
  }
  func.func @transform_7(%arg0: i32) -> (i32, i32) {
    %c0_i32 = arith.constant 0 : i32
    %c0_i32_0 = arith.constant 0 : i32
    %c0_i32_1 = arith.constant 0 : i32
    return %c0_i32, %c0_i32_0 : i32, i32
  }
  func.func @transform_8(%arg0: i32) -> (i32, i32) {
    %c0_i32 = arith.constant 0 : i32
    %c0_i32_0 = arith.constant 0 : i32
    %c0_i32_1 = arith.constant 0 : i32
    return %c0_i32, %c0_i32_0 : i32, i32
  }
  func.func @transform_9(%arg0: i32) -> (i32, i32) {
    %c0_i32 = arith.constant 0 : i32
    %c0_i32_0 = arith.constant 0 : i32
    return %c0_i32, %arg0 : i32, i32
  }
}

</mosaic_0001>

<llo_original>
// kernel: ncf_with_context.1
$region0: #{ncf_with_context.1}
  #allocation0 [shape = 'u32[]', space=smem, size = 0x4, offset = 0x4, fixed_abs, tag = 'smem constant byte address 0x4 - core index']
  #allocation1 [shape = 'u32[72,128]{1,0:T(1,128)}', space=vmem, size = 0x9000, scoped, tag = 'internal scratch']
  #allocation2 [shape = 'f32[1,1]{1,0:T(1,128)S(1)}', space=vmem, size = 0x200, scoped, tag = 'scoped memory for ncf_with_context.1']
  %s0 = inlined_call_operand.vmem [shape: bf16[16,1024], index: 0, kind: input, shape index: {}]
  %s1 = inlined_call_operand.vmem [shape: bf16[16,1024], index: 1, kind: input, shape index: {}]
  %s2 = inlined_call_operand.vmem [shape: bf16[8,1024], index: 2, kind: input, shape index: {}]
  %s3 = inlined_call_operand.vmem [shape: bf16[16,8], index: 3, kind: input, shape index: {}]
  %s4 = inlined_call_operand.vmem [shape: f32[16,1], index: 4, kind: input, shape index: {}]
  %s5 = inlined_call_operand.vmem [shape: bf16[32,48], index: 5, kind: input, shape index: {}]
  %s6 = inlined_call_operand.vmem [shape: f32[32,1], index: 6, kind: input, shape index: {}]
  %s7 = inlined_call_operand.vmem [shape: f32[32,1], index: 7, kind: input, shape index: {}]
  %s8 = inlined_call_operand.<no memory space> [shape: f32[1,1], index: 8, kind: input, shape index: {}]
  %s9 = inlined_call_operand.hbm [shape: f32[1,1024], index: 9, kind: output, shape index: {}]
  %s10 = sld [smem:[#allocation0]]
  $region115: #{ncf_with_context.1} parent=0
    _
  %s12 = ssub.s32 1, %s10
  %s13 = scalar_select 0, %s12, %s10
  %v14 = vstv %s8
  %15 = vst [vmem:[#allocation2] sm:$0x1] %v14
  $region1: #{ncf_with_context.1} parent=0
    #allocation3 [shape = 'u8[32768]{0}', space=vmem, size = 0x8000, scoped, tag = 'input window, operand 0']
    #allocation4 [shape = 'u8[32768]{0}', space=vmem, size = 0x8000, scoped, tag = 'input window, operand 1']
    #allocation5 [shape = 'u8[4096]{0}', space=vmem, size = 0x1000, scoped, tag = 'output window, operand 0']
    #allocation6 [shape = 's32[2]{0}', space=sflag, size = 0x8, scoped, tag = 'scoped memory for ncf_with_context.1']
    %16 = vsyncpa [#allocation6], 0
    %s17 = scalar_lea.sflag [#allocation6], 1
    %18 = vsyncpa %s17, 0
    loop: start=0, step=1, limit=4
    $region2: #{ncf_with_context.1} parent=1 // loop_pre_header
      _
    $region3: #{ncf_with_context.1} parent=1 // loop_header
      %s20 = sphi 0, %s24
      %p21 = scmp.ge.s32.totalorder %s20, 4
      %s30 = sphi 0, %s32
      %s33 = sphi 0, %s30
      %s34 = sphi 0, %s33
      %s50 = sphi 0, %s34
      %s56 = sphi 0, %s58
      %s59 = sphi 0, %s56
      %s60 = sphi 0, %s59
      %s76 = sphi 0, %s60
      %s82 = sphi 0, %s84
      %s85 = sphi 0, %s82
      %s86 = sphi 0, %s85
      %s102 = sphi 0, %s86
      %s106 = sphi 0, %s106
      %s108 = sphi 0, %s106
      %s109 = sphi 0, %s108
      %s123 = sphi 0, %s109
      %s127 = sphi 0, %s127
      %s129 = sphi 0, %s127
      %s130 = sphi 0, %s129
      %s144 = sphi 0, %s130
      %s148 = sphi 0, %s148
      %s150 = sphi 0, %s148
      %s151 = sphi 0, %s150
      %s165 = sphi 0, %s151
      %s169 = sphi 0, %s169
      %s171 = sphi 0, %s169
      %s172 = sphi 0, %s171
      %s186 = sphi 0, %s172
      %s190 = sphi 0, %s190
      %s192 = sphi 0, %s190
      %s193 = sphi 0, %s192
      %s207 = sphi 0, %s193
      %s211 = sphi 0, %s211
      %s213 = sphi 0, %s211
      %s214 = sphi 0, %s213
      %s228 = sphi 0, %s214
      %s234 = sphi 0, %s236
      %s237 = sphi 0, %s234
      %s238 = sphi 0, %s237
      %s254 = sphi 0, %s238
    $region4: #{ncf_with_context.1} parent=1 // loop_header_branch
      %23 = sbr.rel (%p21) target = $region8
    $region5: #{ncf_with_context.1} parent=1 // loop_body
      %s25 = ssub.s32 %s20, 1
      %s26 = ssub.s32 %s20, 2
      %s27 = sadd.s32 %s20, 1
      %s28 = ssub.s32 %s20, %s27
      %p29 = scmp.eq.s32.totalorder %s28, 0
      %s31 = sadd.s32 %s30, 1
      %s32 = scalar_select %p29, %s30, %s31
      %p35 = pneg %p29
      %p36 = scmp.eq.s32.totalorder %s20, 1
      %p37 = por %p35, %p36
      %p38 = scmp.ne.s32.totalorder %s30, %s33
      %p39 = scmp.eq.s32.totalorder %s20, 0
      %p40 = por %p38, %p39
      %p41 = scmp.ne.s32.totalorder %s30, %s33
      %p42 = scmp.eq.s32.totalorder %s25, 1
      %p43 = por %p41, %p42
      %p44 = scmp.ne.s32.totalorder %s33, %s34
      %p45 = scmp.eq.s32.totalorder %s25, 0
      %p46 = por %p44, %p45
      %p47 = scmp.ne.s32.totalorder %s33, %s34
      %p48 = scmp.eq.s32.totalorder %s26, 1
      %p49 = por %p47, %p48
      %p51 = scmp.ne.s32.totalorder %s34, %s50
      %p52 = scmp.eq.s32.totalorder %s26, 0
      %p53 = por %p51, %p52
      %s54 = ssub.s32 %s20, %s27
      %p55 = scmp.eq.s32.totalorder %s54, 0
      %s57 = sadd.s32 %s56, 1
      %s58 = scalar_select %p55, %s56, %s57
      %p61 = pneg %p55
      %p62 = scmp.eq.s32.totalorder %s20, 1
      %p63 = por %p61, %p62
      %p64 = scmp.ne.s32.totalorder %s56, %s59
      %p65 = scmp.eq.s32.totalorder %s20, 0
      %p66 = por %p64, %p65
      %p67 = scmp.ne.s32.totalorder %s56, %s59
      %p68 = scmp.eq.s32.totalorder %s25, 1
      %p69 = por %p67, %p68
      %p70 = scmp.ne.s32.totalorder %s59, %s60
      %p71 = scmp.eq.s32.totalorder %s25, 0
      %p72 = por %p70, %p71
      %p73 = scmp.ne.s32.totalorder %s59, %s60
      %p74 = scmp.eq.s32.totalorder %s26, 1
      %p75 = por %p73, %p74
      %p77 = scmp.ne.s32.totalorder %s60, %s76
      %p78 = scmp.eq.s32.totalorder %s26, 0
      %p79 = por %p77, %p78
      %s80 = ssub.s32 %s20, %s27
      %p81 = scmp.eq.s32.totalorder %s80, 0
      %s83 = sadd.s32 %s82, 1
      %s84 = scalar_select %p81, %s82, %s83
      %p87 = pneg %p81
      %p88 = scmp.eq.s32.totalorder %s20, 1
      %p89 = por %p87, %p88
      %p90 = scmp.ne.s32.totalorder %s82, %s85
      %p91 = scmp.eq.s32.totalorder %s20, 0
      %p92 = por %p90, %p91
      %p93 = scmp.ne.s32.totalorder %s82, %s85
      %p94 = scmp.eq.s32.totalorder %s25, 1
      %p95 = por %p93, %p94
      %p96 = scmp.ne.s32.totalorder %s85, %s86
      %p97 = scmp.eq.s32.totalorder %s25, 0
      %p98 = por %p96, %p97
      %p99 = scmp.ne.s32.totalorder %s85, %s86
      %p100 = scmp.eq.s32.totalorder %s26, 1
      %p101 = por %p99, %p100
      %p103 = scmp.ne.s32.totalorder %s86, %s102
      %p104 = scmp.eq.s32.totalorder %s26, 0
      %p105 = por %p103, %p104
      %s107 = sadd.s32 %s106, 1
      %p110 = scmp.eq.s32.totalorder %s20, 1
      %p111 = scmp.ne.s32.totalorder %s106, %s108
      %p112 = scmp.eq.s32.totalorder %s20, 0
      %p113 = por %p111, %p112
      %p114 = scmp.ne.s32.totalorder %s106, %s108
      %p115 = scmp.eq.s32.totalorder %s25, 1
      %p116 = por %p114, %p115
      %p117 = scmp.ne.s32.totalorder %s108, %s109
      %p118 = scmp.eq.s32.totalorder %s25, 0
      %p119 = por %p117, %p118
      %p120 = scmp.ne.s32.totalorder %s108, %s109
      %p121 = scmp.eq.s32.totalorder %s26, 1
      %p122 = por %p120, %p121
      %p124 = scmp.ne.s32.totalorder %s109, %s123
      %p125 = scmp.eq.s32.totalorder %s26, 0
      %p126 = por %p124, %p125
      %s128 = sadd.s32 %s127, 1
      %p131 = scmp.eq.s32.totalorder %s20, 1
      %p132 = scmp.ne.s32.totalorder %s127, %s129
      %p133 = scmp.eq.s32.totalorder %s20, 0
      %p134 = por %p132, %p133
      %p135 = scmp.ne.s32.totalorder %s127, %s129
      %p136 = scmp.eq.s32.totalorder %s25, 1
      %p137 = por %p135, %p136
      %p138 = scmp.ne.s32.totalorder %s129, %s130
      %p139 = scmp.eq.s32.totalorder %s25, 0
      %p140 = por %p138, %p139
      %p141 = scmp.ne.s32.totalorder %s129, %s130
      %p142 = scmp.eq.s32.totalorder %s26, 1
      %p143 = por %p141, %p142
      %p145 = scmp.ne.s32.totalorder %s130, %s144
      %p146 = scmp.eq.s32.totalorder %s26, 0
      %p147 = por %p145, %p146
      %s149 = sadd.s32 %s148, 1
      %p152 = scmp.eq.s32.totalorder %s20, 1
      %p153 = scmp.ne.s32.totalorder %s148, %s150
      %p154 = scmp.eq.s32.totalorder %s20, 0
      %p155 = por %p153, %p154
      %p156 = scmp.ne.s32.totalorder %s148, %s150
      %p157 = scmp.eq.s32.totalorder %s25, 1
      %p158 = por %p156, %p157
      %p159 = scmp.ne.s32.totalorder %s150, %s151
      %p160 = scmp.eq.s32.totalorder %s25, 0
      %p161 = por %p159, %p160
      %p162 = scmp.ne.s32.totalorder %s150, %s151
      %p163 = scmp.eq.s32.totalorder %s26, 1
      %p164 = por %p162, %p163
      %p166 = scmp.ne.s32.totalorder %s151, %s165
      %p167 = scmp.eq.s32.totalorder %s26, 0
      %p168 = por %p166, %p167
      %s170 = sadd.s32 %s169, 1
      %p173 = scmp.eq.s32.totalorder %s20, 1
      %p174 = scmp.ne.s32.totalorder %s169, %s171
      %p175 = scmp.eq.s32.totalorder %s20, 0
      %p176 = por %p174, %p175
      %p177 = scmp.ne.s32.totalorder %s169, %s171
      %p178 = scmp.eq.s32.totalorder %s25, 1
      %p179 = por %p177, %p178
      %p180 = scmp.ne.s32.totalorder %s171, %s172
      %p181 = scmp.eq.s32.totalorder %s25, 0
      %p182 = por %p180, %p181
      %p183 = scmp.ne.s32.totalorder %s171, %s172
      %p184 = scmp.eq.s32.totalorder %s26, 1
      %p185 = por %p183, %p184
      %p187 = scmp.ne.s32.totalorder %s172, %s186
      %p188 = scmp.eq.s32.totalorder %s26, 0
      %p189 = por %p187, %p188
      %s191 = sadd.s32 %s190, 1
      %p194 = scmp.eq.s32.totalorder %s20, 1
      %p195 = scmp.ne.s32.totalorder %s190, %s192
      %p196 = scmp.eq.s32.totalorder %s20, 0
      %p197 = por %p195, %p196
      %p198 = scmp.ne.s32.totalorder %s190, %s192
      %p199 = scmp.eq.s32.totalorder %s25, 1
      %p200 = por %p198, %p199
      %p201 = scmp.ne.s32.totalorder %s192, %s193
      %p202 = scmp.eq.s32.totalorder %s25, 0
      %p203 = por %p201, %p202
      %p204 = scmp.ne.s32.totalorder %s192, %s193
      %p205 = scmp.eq.s32.totalorder %s26, 1
      %p206 = por %p204, %p205
      %p208 = scmp.ne.s32.totalorder %s193, %s207
      %p209 = scmp.eq.s32.totalorder %s26, 0
      %p210 = por %p208, %p209
      %s212 = sadd.s32 %s211, 1
      %p215 = scmp.eq.s32.totalorder %s20, 1
      %p216 = scmp.ne.s32.totalorder %s211, %s213
      %p217 = scmp.eq.s32.totalorder %s20, 0
      %p218 = por %p216, %p217
      %p219 = scmp.ne.s32.totalorder %s211, %s213
      %p220 = scmp.eq.s32.totalorder %s25, 1
      %p221 = por %p219, %p220
      %p222 = scmp.ne.s32.totalorder %s213, %s214
      %p223 = scmp.eq.s32.totalorder %s25, 0
      %p224 = por %p222, %p223
      %p225 = scmp.ne.s32.totalorder %s213, %s214
      %p226 = scmp.eq.s32.totalorder %s26, 1
      %p227 = por %p225, %p226
      %p229 = scmp.ne.s32.totalorder %s214, %s228
      %p230 = scmp.eq.s32.totalorder %s26, 0
      %p231 = por %p229, %p230
      %s232 = ssub.s32 %s20, %s27
      %p233 = scmp.eq.s32.totalorder %s232, 0
      %s235 = sadd.s32 %s234, 1
      %s236 = scalar_select %p233, %s234, %s235
      %p239 = pneg %p233
      %p240 = scmp.eq.s32.totalorder %s20, 1
      %p241 = por %p239, %p240
      %p242 = scmp.ne.s32.totalorder %s234, %s237
      %p243 = scmp.eq.s32.totalorder %s20, 0
      %p244 = por %p242, %p243
      %p245 = scmp.ne.s32.totalorder %s234, %s237
      %p246 = scmp.eq.s32.totalorder %s25, 1
      %p247 = por %p245, %p246
      %p248 = scmp.ne.s32.totalorder %s237, %s238
      %p249 = scmp.eq.s32.totalorder %s25, 0
      %p250 = por %p248, %p249
      %p251 = scmp.ne.s32.totalorder %s237, %s238
      %p252 = scmp.eq.s32.totalorder %s26, 1
      %p253 = por %p251, %p252
      %p255 = scmp.ne.s32.totalorder %s238, %s254
      %p256 = scmp.eq.s32.totalorder %s26, 0
      %p257 = por %p255, %p256
      %p258 = scmp.le.s32.totalorder 1, %s20
      %p259 = scmp.lt.s32.totalorder %s20, 3
      %p260 = pnand %p258, %p259
      %p261 = pneg %p260
      // Predicated region
      $region9: #{ncf_with_context.1} parent=5 // pred_check
        _
      $region10: #{ncf_with_context.1} parent=5 // pred_check_branch
        %263 = sbr.rel (%p260) target = $region12
      $region11: #{ncf_with_context.1} parent=5 // pred_region
        %s264 = ssub.s32 %s20, 1
        // Predicated region
        $region13: #{ncf_with_context.1} parent=11 // pred_check
          %p265 = pneg %p119
        $region14: #{ncf_with_context.1} parent=11 // pred_check_branch
          %267 = sbr.rel (%p265) target = $region16
        $region15: #{ncf_with_context.1} parent=11 // pred_region
          _
        $region16: #{ncf_with_context.1} parent=11 // pred_fallthru
          _
        // Predicated region
        $region17: #{ncf_with_context.1} parent=11 // pred_check
          %p268 = pneg %p140
        $region18: #{ncf_with_context.1} parent=11 // pred_check_branch
          %270 = sbr.rel (%p268) target = $region20
        $region19: #{ncf_with_context.1} parent=11 // pred_region
          _
        $region20: #{ncf_with_context.1} parent=11 // pred_fallthru
          _
        // Predicated region
        $region21: #{ncf_with_context.1} parent=11 // pred_check
          %p271 = pneg %p161
        $region22: #{ncf_with_context.1} parent=11 // pred_check_branch
          %273 = sbr.rel (%p271) target = $region24
        $region23: #{ncf_with_context.1} parent=11 // pred_region
          _
        $region24: #{ncf_with_context.1} parent=11 // pred_fallthru
          _
        // Predicated region
        $region25: #{ncf_with_context.1} parent=11 // pred_check
          %p274 = pneg %p182
        $region26: #{ncf_with_context.1} parent=11 // pred_check_branch
          %276 = sbr.rel (%p274) target = $region28
        $region27: #{ncf_with_context.1} parent=11 // pred_region
          _
        $region28: #{ncf_with_context.1} parent=11 // pred_fallthru
          _
        // Predicated region
        $region29: #{ncf_with_context.1} parent=11 // pred_check
          %p277 = pneg %p203
        $region30: #{ncf_with_context.1} parent=11 // pred_check_branch
          %279 = sbr.rel (%p277) target = $region32
        $region31: #{ncf_with_context.1} parent=11 // pred_region
          _
        $region32: #{ncf_with_context.1} parent=11 // pred_fallthru
          _
        // Predicated region
        $region33: #{ncf_with_context.1} parent=11 // pred_check
          %p280 = pneg %p224
        $region34: #{ncf_with_context.1} parent=11 // pred_check_branch
          %282 = sbr.rel (%p280) target = $region36
        $region35: #{ncf_with_context.1} parent=11 // pred_region
          _
        $region36: #{ncf_with_context.1} parent=11 // pred_fallthru
          _
      $region12: #{ncf_with_context.1} parent=5 // pred_fallthru
        _
      %p283 = scmp.lt.s32.totalorder %s20, 2
      // Predicated region
      $region37: #{ncf_with_context.1} parent=5 // pred_check
        %p284 = pneg %p283
      $region38: #{ncf_with_context.1} parent=5 // pred_check_branch
        %286 = sbr.rel (%p284) target = $region40
      $region39: #{ncf_with_context.1} parent=5 // pred_region
        // Predicated region
        $region41: #{ncf_with_context.1} parent=39 // pred_check
          %p287 = pneg %p40
        $region42: #{ncf_with_context.1} parent=39 // pred_check_branch
          %289 = sbr.rel (%p287) target = $region44
        $region43: #{ncf_with_context.1} parent=39 // pred_region
          %s290 = sand.u32 %s30, 1
          %s291 = sand.u32 %s30, 1
          %s292 = smul.addr %s291, 32
          %s293 = scalar_lea.vmem [#allocation3], %s292
          %s294 = smul.u32 4, %s20
          %s295 = smul.addr %s294, 4
          %s296 = scalar_lea.vmem %s0, %s295
          // Predicated region
          $region45: #{ncf_with_context.1} parent=43 // pred_check
            _
          $region46: #{ncf_with_context.1} parent=43 // pred_check_branch
            %298 = sbr.rel (0) target = $region48
          $region47: #{ncf_with_context.1} parent=43 // pred_region
            // Predicated region
            $region49: #{ncf_with_context.1} parent=47 // pred_check
              _
            $region50: #{ncf_with_context.1} parent=47 // pred_check_branch
              %300 = sbr.rel (0) target = $region52
            $region51: #{ncf_with_context.1} parent=47 // pred_region
              loop: start=0, step=1, limit=1
              $region53: #{ncf_with_context.1} parent=51 // loop_pre_header
                _
              $region54: #{ncf_with_context.1} parent=51 // loop_header
                %s302 = sphi 0, %s306
                %p303 = scmp.ge.s32.totalorder %s302, 1
                %s307 = sphi %s296, %s296
                %s308 = sphi %s293, %s293
              $region55: #{ncf_with_context.1} parent=51 // loop_header_branch
                %305 = sbr.rel (%p303) target = $region59
              $region56: #{ncf_with_context.1} parent=51 // loop_body
                %v309 = vld [vmem:[%s307] sm:$0xff]
                %310 = vst [vmem:[%s308] sm:$0xff] %v309
                %v311 = vld [vmem:[%s307 + $0x8] sm:$0xff]
                %312 = vst [vmem:[%s308 + $0x8] sm:$0xff] %v311
                %v313 = vld [vmem:[%s307 + $0x20] sm:$0xff]
                %314 = vst [vmem:[%s308 + $0x10] sm:$0xff] %v313
                %v315 = vld [vmem:[%s307 + $0x28] sm:$0xff]
                %316 = vst [vmem:[%s308 + $0x18] sm:$0xff] %v315
              $region57: #{ncf_with_context.1} parent=51 // loop_footer
                %s306 = sadd.s32 1, %s302
              $region58: #{ncf_with_context.1} parent=51 // loop_footer_branch
                %301 = sbr.rel target = $region54
              $region59: #{ncf_with_context.1} parent=51 // loop_exit
                _
            $region52: #{ncf_with_context.1} parent=47 // pred_fallthru
              _
            // Predicated region
            $region60: #{ncf_with_context.1} parent=47 // pred_check
              _
            $region61: #{ncf_with_context.1} parent=47 // pred_check_branch
              %318 = sbr.rel target = $region63
            $region62: #{ncf_with_context.1} parent=47 // pred_region
              _
            $region63: #{ncf_with_context.1} parent=47 // pred_fallthru
              _
          $region48: #{ncf_with_context.1} parent=43 // pred_fallthru
            _
          %319 = vnop
        $region44: #{ncf_with_context.1} parent=39 // pred_fallthru
          _
        // Predicated region
        $region64: #{ncf_with_context.1} parent=39 // pred_check
          %p320 = pneg %p66
        $region65: #{ncf_with_context.1} parent=39 // pred_check_branch
          %322 = sbr.rel (%p320) target = $region67
        $region66: #{ncf_with_context.1} parent=39 // pred_region
          %s323 = sand.u32 %s56, 1
          %s324 = sand.u32 %s56, 1
          %s325 = smul.addr %s324, 32
          %s326 = scalar_lea.vmem [#allocation4], %s325
          %s327 = smul.u32 4, %s20
          %s328 = smul.addr %s327, 4
          %s329 = scalar_lea.vmem %s1, %s328
          // Predicated region
          $region68: #{ncf_with_context.1} parent=66 // pred_check
            _
          $region69: #{ncf_with_context.1} parent=66 // pred_check_branch
            %331 = sbr.rel (0) target = $region71
          $region70: #{ncf_with_context.1} parent=66 // pred_region
            // Predicated region
            $region72: #{ncf_with_context.1} parent=70 // pred_check
              _
            $region73: #{ncf_with_context.1} parent=70 // pred_check_branch
              %333 = sbr.rel (0) target = $region75
            $region74: #{ncf_with_context.1} parent=70 // pred_region
              loop: start=0, step=1, limit=1
              $region76: #{ncf_with_context.1} parent=74 // loop_pre_header
                _
              $region77: #{ncf_with_context.1} parent=74 // loop_header
                %s335 = sphi 0, %s339
                %p336 = scmp.ge.s32.totalorder %s335, 1
                %s340 = sphi %s329, %s329
                %s341 = sphi %s326, %s326
              $region78: #{ncf_with_context.1} parent=74 // loop_header_branch
                %338 = sbr.rel (%p336) target = $region82
              $region79: #{ncf_with_context.1} parent=74 // loop_body
                %v342 = vld [vmem:[%s340] sm:$0xff]
                %343 = vst [vmem:[%s341] sm:$0xff] %v342
                %v344 = vld [vmem:[%s340 + $0x8] sm:$0xff]
                %345 = vst [vmem:[%s341 + $0x8] sm:$0xff] %v344
                %v346 = vld [vmem:[%s340 + $0x20] sm:$0xff]
                %347 = vst [vmem:[%s341 + $0x10] sm:$0xff] %v346
                %v348 = vld [vmem:[%s340 + $0x28] sm:$0xff]
                %349 = vst [vmem:[%s341 + $0x18] sm:$0xff] %v348
              $region80: #{ncf_with_context.1} parent=74 // loop_footer
                %s339 = sadd.s32 1, %s335
              $region81: #{ncf_with_context.1} parent=74 // loop_footer_branch
                %334 = sbr.rel target = $region77
              $region82: #{ncf_with_context.1} parent=74 // loop_exit
                _
            $region75: #{ncf_with_context.1} parent=70 // pred_fallthru
              _
            // Predicated region
            $region83: #{ncf_with_context.1} parent=70 // pred_check
              _
            $region84: #{ncf_with_context.1} parent=70 // pred_check_branch
              %351 = sbr.rel target = $region86
            $region85: #{ncf_with_context.1} parent=70 // pred_region
              _
            $region86: #{ncf_with_context.1} parent=70 // pred_fallthru
              _
          $region71: #{ncf_with_context.1} parent=66 // pred_fallthru
            _
          %352 = vnop
        $region67: #{ncf_with_context.1} parent=39 // pred_fallthru
          _
        // Predicated region
        $region87: #{ncf_with_context.1} parent=39 // pred_check
          %p353 = pneg %p92
        $region88: #{ncf_with_context.1} parent=39 // pred_check_branch
          %355 = sbr.rel (%p353) target = $region90
        $region89: #{ncf_with_context.1} parent=39 // pred_region
          %s356 = smul.u32 4, %s20
          %p357 = scmp.lt.s32.totalorder %s356, 7
          %s358 = scalar_select %p357, %s356, 7
          %s359 = smul.addr %s358, 4
          %s360 = scalar_lea.vmem %s2, %s359
          %s361 = smul.u32 4, %s20
        $region90: #{ncf_with_context.1} parent=39 // pred_fallthru
          _
      $region40: #{ncf_with_context.1} parent=5 // pred_fallthru
        _
      %p362 = scmp.le.s32.totalorder 1, %s20
      %p363 = scmp.lt.s32.totalorder %s20, 3
      %p364 = pnand %p362, %p363
      %p365 = pneg %p364
      // Predicated region
      $region91: #{ncf_with_context.1} parent=5 // pred_check
        _
      $region92: #{ncf_with_context.1} parent=5 // pred_check_branch
        %367 = sbr.rel (%p364) target = $region94
      $region93: #{ncf_with_context.1} parent=5 // pred_region
        %s368 = ssub.s32 %s20, 1
        %s369 = sand.u32 %s33, 1
        %s370 = sand.u32 %s33, 1
        %s371 = smul.addr %s370, 32
        %s372 = scalar_lea.vmem [#allocation3], %s371
        // Predicated region
        $region95: #{ncf_with_context.1} parent=93 // pred_check
          %p373 = pneg %p46
        $region96: #{ncf_with_context.1} parent=93 // pred_check_branch
          %375 = sbr.rel (%p373) target = $region98
        $region97: #{ncf_with_context.1} parent=93 // pred_region
          _
        $region98: #{ncf_with_context.1} parent=93 // pred_fallthru
          _
        %s376 = sand.u32 %s59, 1
        %s377 = sand.u32 %s59, 1
        %s378 = smul.addr %s377, 32
        %s379 = scalar_lea.vmem [#allocation4], %s378
        // Predicated region
        $region99: #{ncf_with_context.1} parent=93 // pred_check
          %p380 = pneg %p72
        $region100: #{ncf_with_context.1} parent=93 // pred_check_branch
          %382 = sbr.rel (%p380) target = $region102
        $region101: #{ncf_with_context.1} parent=93 // pred_region
          _
        $region102: #{ncf_with_context.1} parent=93 // pred_fallthru
          _
        %s383 = sand.u32 %s33, 1
        %s384 = sand.u32 %s33, 1
        %s385 = smul.addr %s384, 32
        %s386 = scalar_lea.vmem [#allocation3], %s385
        %p387 = pneg %p46
        %p388 = pneg %p43
        %s389 = sand.u32 %s59, 1
        %s390 = sand.u32 %s59, 1
        %s391 = smul.addr %s390, 32
        %s392 = scalar_lea.vmem [#allocation4], %s391
        %p393 = pneg %p72
        %p394 = pneg %p69
        %s395 = smul.u32 4, %s25
        %p396 = scmp.lt.s32.totalorder %s395, 7
        %s397 = scalar_select %p396, %s395, 7
        %s398 = smul.addr %s397, 4
        %s399 = scalar_lea.vmem %s2, %s398
        %p400 = pneg %p98
        %p401 = pneg %p95
        %p402 = pneg %p119
        %p403 = pneg %p116
        %p404 = pneg %p140
        %p405 = pneg %p137
        %p406 = pneg %p161
        %p407 = pneg %p158
        %p408 = pneg %p182
        %p409 = pneg %p179
        %p410 = pneg %p203
        %p411 = pneg %p200
        %p412 = pneg %p224
        %p413 = pneg %p221
        %p414 = pneg %p250
        %p415 = pneg %p247
        %s416 = sand.u32 %s237, 1
        %s417 = scalar_lea.sflag [#allocation6], %s416
        %s418 = sand.u32 %s237, 1
        %s419 = smul.addr %s418, 4
        %s420 = scalar_lea.vmem [#allocation5], %s419
        %s421 = smul.u32 4, %s25
        %s422 = smul.u32 4, %s25
        %s423 = smul.u32 4, %s25
        %p424 = scmp.lt.s32.totalorder %s423, 7
        %s425 = scalar_select %p424, %s423, 7
        %s426 = smul.addr %s425, 4
        %s427 = scalar_lea.vmem %s2, %s426
        %s428 = smul.u32 4, %s25
        %s429 = smul.u32 4, %s25
        %v431 = vld [vmem:[%s3] sm:$0xf]
        %v432 = vld [vmem:[%s3 + $0x4] sm:$0xf]
        %v433 = vld [vmem:[%s427] sm:$0xff]
        %v434 = vld [vmem:[%s427 + $0x8] sm:$0xff]
        %v435 = vld [vmem:[%s4] sm:$0xff]
        %v436 = vld [vmem:[%s4 + $0x8] sm:$0xff]
        %438 = vset.pattern.permute.xlu0 0
        %439 = vperm.xlu0 %438, %v435
        %v440 = vpop.permute.xlu0 %439
        %443 = vset.pattern.permute.xlu0 0
        %444 = vperm.xlu0 %443, %v436
        %v445 = vpop.permute.xlu0 %444
        %v449 = vunpack.c.l.b16 %v431
        %v450 = vunpack.c.l.b16 %v432
        %v451 = vpack.c.b16 %v450, %v449
        %v454 = vunpack.c.l.b16 %v433
        %v455 = vunpack.c.h.b16 %v433
        %v456 = vunpack.c.l.b16 %v434
        %v457 = vunpack.c.h.b16 %v434
        %v458 = vpack.c.b16 %v454, %v454
        %v459 = vpack.c.b16 %v455, %v455
        %v460 = vpack.c.b16 %v456, %v456
        %v461 = vpack.c.b16 %v457, %v457
        %vm462 = vcmask 64512
        %v464 = vsel %vm462, %v451, 0
        %vm466 = vcmask 1043456
        %v468 = vsel %vm466, %v458, 0
        %v471 = vsel %vm466, %v459, 0
        %v474 = vsel %vm466, %v460, 0
        %v477 = vsel %vm466, %v461, 0
        %479 = vmatpush.bf16.msra.mxu0 0
        %480 = vmatpush.bf16.msra.mxu0 0
        %481 = vmatpush.bf16.msra.mxu0 0
        %482 = vmatpush.bf16.msra.mxu0 0
        %483 = vmatpush.bf16.msra.mxu0 0
        %484 = vmatpush.bf16.msra.mxu0 0
        %485 = vmatpush.bf16.msra.mxu0 0
        %486 = vmatpush.bf16.msra.mxu0 %v468
        %487 = vmatmul.bf16.gmra.mxu0 %v464
        %v488 = vpop.f32.mrf.mxu0
        %v489 = vadd.f32 %v440, %v488
        %v490 = vpop.f32.mrf.mxu0
        %v491 = vadd.f32 %v445, %v490
        %492 = vdwg.mxu0
        %493 = vmatpush.bf16.msra.mxu0 0
        %494 = vmatpush.bf16.msra.mxu0 0
        %495 = vmatpush.bf16.msra.mxu0 0
        %496 = vmatpush.bf16.msra.mxu0 0
        %497 = vmatpush.bf16.msra.mxu0 0
        %498 = vmatpush.bf16.msra.mxu0 0
        %499 = vmatpush.bf16.msra.mxu0 0
        %500 = vmatpush.bf16.msra.mxu0 %v471
        %501 = vmatmul.bf16.gmra.mxu0 %v464
        %v502 = vpop.f32.mrf.mxu0
        %v503 = vadd.f32 %v440, %v502
        %v504 = vpop.f32.mrf.mxu0
        %v505 = vadd.f32 %v445, %v504
        %506 = vdwg.mxu0
        %507 = vmatpush.bf16.msra.mxu0 0
        %508 = vmatpush.bf16.msra.mxu0 0
        %509 = vmatpush.bf16.msra.mxu0 0
        %510 = vmatpush.bf16.msra.mxu0 0
        %511 = vmatpush.bf16.msra.mxu0 0
        %512 = vmatpush.bf16.msra.mxu0 0
        %513 = vmatpush.bf16.msra.mxu0 0
        %514 = vmatpush.bf16.msra.mxu0 %v474
        %515 = vmatmul.bf16.gmra.mxu0 %v464
        %v516 = vpop.f32.mrf.mxu0
        %v517 = vadd.f32 %v440, %v516
        %v518 = vpop.f32.mrf.mxu0
        %v519 = vadd.f32 %v445, %v518
        %520 = vdwg.mxu0
        %521 = vmatpush.bf16.msra.mxu0 0
        %522 = vmatpush.bf16.msra.mxu0 0
        %523 = vmatpush.bf16.msra.mxu0 0
        %524 = vmatpush.bf16.msra.mxu0 0
        %525 = vmatpush.bf16.msra.mxu0 0
        %526 = vmatpush.bf16.msra.mxu0 0
        %527 = vmatpush.bf16.msra.mxu0 0
        %528 = vmatpush.bf16.msra.mxu0 %v477
        %529 = vmatmul.bf16.gmra.mxu0 %v464
        %v530 = vpop.f32.mrf.mxu0
        %v531 = vadd.f32 %v440, %v530
        %v532 = vpop.f32.mrf.mxu0
        %v533 = vadd.f32 %v445, %v532
        %534 = vdwg.mxu0
        %v535 = vld [vmem:[%s372] sm:$0xff]
        %v536 = vld [vmem:[%s372 + $0x8] sm:$0xff]
        %v537 = vld [vmem:[%s372 + $0x10] sm:$0xff]
        %v538 = vld [vmem:[%s372 + $0x18] sm:$0xff]
        %v539 = vld [vmem:[%s379] sm:$0xff]
        %v540 = vld [vmem:[%s379 + $0x8] sm:$0xff]
        %v541 = vld [vmem:[%s379 + $0x10] sm:$0xff]
        %v542 = vld [vmem:[%s379 + $0x18] sm:$0xff]
        %v543 = vpack.c.bf16 %v503, %v489
        %v544 = vpack.c.bf16 %v531, %v517
        %v545 = vpack.c.bf16 %v505, %v491
        %v546 = vpack.c.bf16 %v533, %v519
        %v551 = vunpack.c.l.b16 %v535
        %v552 = vunpack.c.h.b16 %v535
        %v553 = vunpack.c.l.b16 %v536
        %v554 = vunpack.c.h.b16 %v536
        %v555 = vunpack.c.l.b16 %v537
        %v556 = vunpack.c.h.b16 %v537
        %v557 = vunpack.c.l.b16 %v538
        %v558 = vunpack.c.h.b16 %v538
        %v559 = vpack.c.b16 %v555, %v551
        %v560 = vpack.c.b16 %v556, %v552
        %v561 = vpack.c.b16 %v557, %v553
        %v562 = vpack.c.b16 %v558, %v554
        %v571 = vunpack.c.l.b16 %v539
        %v572 = vunpack.c.h.b16 %v539
        %v573 = vunpack.c.l.b16 %v540
        %v574 = vunpack.c.h.b16 %v540
        %v575 = vunpack.c.l.b16 %v541
        %v576 = vunpack.c.h.b16 %v541
        %v577 = vunpack.c.l.b16 %v542
        %v578 = vunpack.c.h.b16 %v542
        %v579 = vpack.c.b16 %v575, %v571
        %v580 = vpack.c.b16 %v576, %v572
        %v581 = vpack.c.b16 %v577, %v573
        %v582 = vpack.c.b16 %v578, %v574
        %v591 = vunpack.c.l.b16 %v543
        %v592 = vunpack.c.h.b16 %v543
        %v593 = vunpack.c.l.b16 %v544
        %v594 = vunpack.c.h.b16 %v544
        %v595 = vunpack.c.l.b16 %v545
        %v596 = vunpack.c.h.b16 %v545
        %v597 = vunpack.c.l.b16 %v546
        %v598 = vunpack.c.h.b16 %v546
        %v599 = vpack.c.b16 %v595, %v591
        %v600 = vpack.c.b16 %v596, %v592
        %v601 = vpack.c.b16 %v597, %v593
        %v602 = vpack.c.b16 %v598, %v594
        %v607 = vld [vmem:[%s5] sm:$0xf]
        %v608 = vld [vmem:[%s5 + $0x4] sm:$0xf]
        %v609 = vld [vmem:[%s5 + $0x8] sm:$0xf]
        %v610 = vld [vmem:[%s5 + $0xc] sm:$0xf]
        %v611 = vld [vmem:[%s6] sm:$0xff]
        %v612 = vld [vmem:[%s6 + $0x8] sm:$0xff]
        %v613 = vld [vmem:[%s6 + $0x10] sm:$0xff]
        %v614 = vld [vmem:[%s6 + $0x18] sm:$0xff]
        %616 = vset.pattern.permute.xlu0 0
        %617 = vperm.xlu0 %616, %v611
        %v618 = vpop.permute.xlu0 %617
        %621 = vset.pattern.permute.xlu0 0
        %622 = vperm.xlu0 %621, %v612
        %v623 = vpop.permute.xlu0 %622
        %626 = vset.pattern.permute.xlu0 0
        %627 = vperm.xlu0 %626, %v613
        %v628 = vpop.permute.xlu0 %627
        %631 = vset.pattern.permute.xlu0 0
        %632 = vperm.xlu0 %631, %v614
        %v633 = vpop.permute.xlu0 %632
        %v639 = vunpack.c.l.b16 %v607
        %v640 = vunpack.c.l.b16 %v608
        %v641 = vunpack.c.l.b16 %v609
        %v642 = vunpack.c.l.b16 %v610
        %v643 = vpack.c.b16 %v640, %v639
        %v644 = vpack.c.b16 %v642, %v641
        %vm645 = vcmask 392192
        %v647 = vsel %vm645, %v643, 0
        %v650 = vsel %vm645, %v644, 0
        %652 = vmatpush.bf16.msra.mxu0 0
        %653 = vmatpush.bf16.msra.mxu0 0
        %654 = vmatpush.bf16.msra.mxu0 0
        %655 = vmatpush.bf16.msra.mxu0 0
        %656 = vmatpush.bf16.msra.mxu0 0
        %657 = vmatpush.bf16.msra.mxu0 %v599
        %658 = vmatpush.bf16.msra.mxu0 %v579
        %659 = vmatpush.bf16.msra.mxu0 %v559
        %660 = vmatmul.bf16.gmra.mxu0 %v647
        %v661 = vpop.f32.mrf.mxu0
        %v662 = vadd.f32 %v618, %v661
        %v663 = vpop.f32.mrf.mxu0
        %v664 = vadd.f32 %v623, %v663
        %665 = vmatmul.bf16.gmra.mxu0 %v650
        %v666 = vpop.f32.mrf.mxu0
        %v667 = vadd.f32 %v628, %v666
        %v668 = vpop.f32.mrf.mxu0
        %v669 = vadd.f32 %v633, %v668
        %670 = vdwg.mxu0
        %671 = vmatpush.bf16.msra.mxu0 0
        %672 = vmatpush.bf16.msra.mxu0 0
        %673 = vmatpush.bf16.msra.mxu0 0
        %674 = vmatpush.bf16.msra.mxu0 0
        %675 = vmatpush.bf16.msra.mxu0 0
        %676 = vmatpush.bf16.msra.mxu0 %v600
        %677 = vmatpush.bf16.msra.mxu0 %v580
        %678 = vmatpush.bf16.msra.mxu0 %v560
        %679 = vmatmul.bf16.gmra.mxu0 %v647
        %v680 = vpop.f32.mrf.mxu0
        %v681 = vadd.f32 %v618, %v680
        %v682 = vpop.f32.mrf.mxu0
        %v683 = vadd.f32 %v623, %v682
        %684 = vmatmul.bf16.gmra.mxu0 %v650
        %v685 = vpop.f32.mrf.mxu0
        %v686 = vadd.f32 %v628, %v685
        %v687 = vpop.f32.mrf.mxu0
        %v688 = vadd.f32 %v633, %v687
        %689 = vdwg.mxu0
        %690 = vmatpush.bf16.msra.mxu0 0
        %691 = vmatpush.bf16.msra.mxu0 0
        %692 = vmatpush.bf16.msra.mxu0 0
        %693 = vmatpush.bf16.msra.mxu0 0
        %694 = vmatpush.bf16.msra.mxu0 0
        %695 = vmatpush.bf16.msra.mxu0 %v601
        %696 = vmatpush.bf16.msra.mxu0 %v581
        %697 = vmatpush.bf16.msra.mxu0 %v561
        %698 = vmatmul.bf16.gmra.mxu0 %v647
        %v699 = vpop.f32.mrf.mxu0
        %v700 = vadd.f32 %v618, %v699
        %v701 = vpop.f32.mrf.mxu0
        %v702 = vadd.f32 %v623, %v701
        %703 = vmatmul.bf16.gmra.mxu0 %v650
        %v704 = vpop.f32.mrf.mxu0
        %v705 = vadd.f32 %v628, %v704
        %v706 = vpop.f32.mrf.mxu0
        %v707 = vadd.f32 %v633, %v706
        %708 = vdwg.mxu0
        %709 = vmatpush.bf16.msra.mxu0 0
        %710 = vmatpush.bf16.msra.mxu0 0
        %711 = vmatpush.bf16.msra.mxu0 0
        %712 = vmatpush.bf16.msra.mxu0 0
        %713 = vmatpush.bf16.msra.mxu0 0
        %714 = vmatpush.bf16.msra.mxu0 %v602
        %715 = vmatpush.bf16.msra.mxu0 %v582
        %716 = vmatpush.bf16.msra.mxu0 %v562
        %717 = vmatmul.bf16.gmra.mxu0 %v647
        %v718 = vpop.f32.mrf.mxu0
        %v719 = vadd.f32 %v618, %v718
        %v720 = vpop.f32.mrf.mxu0
        %v721 = vadd.f32 %v623, %v720
        %722 = vmatmul.bf16.gmra.mxu0 %v650
        %v723 = vpop.f32.mrf.mxu0
        %v724 = vadd.f32 %v628, %v723
        %v725 = vpop.f32.mrf.mxu0
        %v726 = vadd.f32 %v633, %v725
        %727 = vdwg.mxu0
        %v728 = vmax.f32 %v662, 0.0
        %v729 = vmax.f32 %v681, 0.0
        %v730 = vmax.f32 %v700, 0.0
        %v731 = vmax.f32 %v719, 0.0
        %v732 = vmax.f32 %v664, 0.0
        %v733 = vmax.f32 %v683, 0.0
        %v734 = vmax.f32 %v702, 0.0
        %v735 = vmax.f32 %v721, 0.0
        %v736 = vmax.f32 %v667, 0.0
        %v737 = vmax.f32 %v686, 0.0
        %v738 = vmax.f32 %v705, 0.0
        %v739 = vmax.f32 %v724, 0.0
        %v740 = vmax.f32 %v669, 0.0
        %v741 = vmax.f32 %v688, 0.0
        %v742 = vmax.f32 %v707, 0.0
        %v743 = vmax.f32 %v726, 0.0
        %v744 = vld [vmem:[%s7] sm:$0xff]
        %v745 = vld [vmem:[%s7 + $0x8] sm:$0xff]
        %v746 = vld [vmem:[%s7 + $0x10] sm:$0xff]
        %v747 = vld [vmem:[%s7 + $0x18] sm:$0xff]
        %749 = vset.pattern.permute.xlu0 0
        %750 = vperm.xlu0 %749, %v744
        %v751 = vpop.permute.xlu0 %750
        %754 = vset.pattern.permute.xlu0 0
        %755 = vperm.xlu0 %754, %v745
        %v756 = vpop.permute.xlu0 %755
        %759 = vset.pattern.permute.xlu0 0
        %760 = vperm.xlu0 %759, %v746
        %v761 = vpop.permute.xlu0 %760
        %764 = vset.pattern.permute.xlu0 0
        %765 = vperm.xlu0 %764, %v747
        %v766 = vpop.permute.xlu0 %765
        %v768 = vmul.f32 %v728, %v751
        %v769 = vmul.f32 %v729, %v751
        %v770 = vmul.f32 %v730, %v751
        %v771 = vmul.f32 %v731, %v751
        %v772 = vmul.f32 %v732, %v756
        %v773 = vmul.f32 %v733, %v756
        %v774 = vmul.f32 %v734, %v756
        %v775 = vmul.f32 %v735, %v756
        %v776 = vmul.f32 %v736, %v761
        %v777 = vmul.f32 %v737, %v761
        %v778 = vmul.f32 %v738, %v761
        %v779 = vmul.f32 %v739, %v761
        %v780 = vmul.f32 %v740, %v766
        %v781 = vmul.f32 %v741, %v766
        %v782 = vmul.f32 %v742, %v766
        %v783 = vmul.f32 %v743, %v766
        %v784 = vadd.f32 %v768, %v772
        %v785 = vadd.f32 %v784, %v776
        %v786 = vadd.f32 %v785, %v780
        %v787 = vrot.slane %v786, 4
        %v788 = vadd.f32 %v786, %v787
        %v789 = vrot.slane %v788, 2
        %v790 = vadd.f32 %v788, %v789
        %v791 = vrot.slane %v790, 1
        %v792 = vadd.f32 %v790, %v791
        %v793 = vadd.f32 %v769, %v773
        %v794 = vadd.f32 %v793, %v777
        %v795 = vadd.f32 %v794, %v781
        %v796 = vrot.slane %v795, 4
        %v797 = vadd.f32 %v795, %v796
        %v798 = vrot.slane %v797, 2
        %v799 = vadd.f32 %v797, %v798
        %v800 = vrot.slane %v799, 1
        %v801 = vadd.f32 %v799, %v800
        %v802 = vadd.f32 %v770, %v774
        %v803 = vadd.f32 %v802, %v778
        %v804 = vadd.f32 %v803, %v782
        %v805 = vrot.slane %v804, 4
        %v806 = vadd.f32 %v804, %v805
        %v807 = vrot.slane %v806, 2
        %v808 = vadd.f32 %v806, %v807
        %v809 = vrot.slane %v808, 1
        %v810 = vadd.f32 %v808, %v809
        %v811 = vadd.f32 %v771, %v775
        %v812 = vadd.f32 %v811, %v779
        %v813 = vadd.f32 %v812, %v783
        %v814 = vrot.slane %v813, 4
        %v815 = vadd.f32 %v813, %v814
        %v816 = vrot.slane %v815, 2
        %v817 = vadd.f32 %v815, %v816
        %v818 = vrot.slane %v817, 1
        %v819 = vadd.f32 %v817, %v818
        %v820 = vld [vmem:[#allocation2] sm:$0x1]
        %822 = vset.pattern.permute.xlu0 0
        %823 = vperm.xlu0 %822, %v820
        %v824 = vpop.permute.xlu0 %823
        %v826 = vperm.slane %v824, 0
        %v827 = vadd.f32 %v792, %v826
        %v828 = vadd.f32 %v801, %v826
        %v829 = vadd.f32 %v810, %v826
        %v830 = vadd.f32 %v819, %v826
        %v835 = vrot.slane %v828, 7
        %v836 = vrot.slane %v829, 6
        %v837 = vrot.slane %v830, 5
        %vm838 = vcmask 1040384
        %v839 = vsel %vm838, %v827, %v835
        %vm840 = vcmask 1042434
        %v841 = vsel %vm840, %v836, %v837
        %vm842 = vcmask 1041408
        %v843 = vsel %vm842, %v839, %v841
        %v845 = vlaneseq
        %vm846 = vcmp.ge.s32.totalorder %v845, 0
        %vm847 = vcmp.lt.s32.totalorder %v845, 512
        %vm848 = vmand %vm846, %vm847
        %849 = vst.msk [vmem:[%s420] sm:$0xf] %vm848, %v843
        %s850 = sand.u32 %s237, 1
        %s851 = scalar_lea.sflag [#allocation6], %s850
        %s852 = sand.u32 %s237, 1
        %s853 = smul.addr %s852, 4
        %s854 = scalar_lea.vmem [#allocation5], %s853
        // Predicated region
        $region103: #{ncf_with_context.1} parent=93 // pred_check
          %p855 = pneg %p247
        $region104: #{ncf_with_context.1} parent=93 // pred_check_branch
          %857 = sbr.rel (%p855) target = $region106
        $region105: #{ncf_with_context.1} parent=93 // pred_region
          %s858 = smul.u32 4, %s25
          %860 = vsyncadd %s851, 0
          %s861 = scalar_lea.hbm %s9, %s858
          %s863 = sshll.u32 %s854, 4
          %s864 = int_to_ptr.vmem [resolvable:$true] %s863
          %s865 = sshll.u32 %s861, 4
          %s866 = int_to_ptr.hbm [resolvable:$true] %s865
          %868 = dma.vmem_to_hbm [thread:$0]  %s864, 64, %s866, %s851
        $region106: #{ncf_with_context.1} parent=93 // pred_fallthru
          _
      $region94: #{ncf_with_context.1} parent=5 // pred_fallthru
        _
      %p869 = scmp.le.s32.totalorder 2, %s20
      // Predicated region
      $region107: #{ncf_with_context.1} parent=5 // pred_check
        %p870 = pneg %p869
      $region108: #{ncf_with_context.1} parent=5 // pred_check_branch
        %872 = sbr.rel (%p870) target = $region110
      $region109: #{ncf_with_context.1} parent=5 // pred_region
        %s873 = ssub.s32 %s20, 2
        // Predicated region
        $region111: #{ncf_with_context.1} parent=109 // pred_check
          %p874 = pneg %p253
        $region112: #{ncf_with_context.1} parent=109 // pred_check_branch
          %876 = sbr.rel (%p874) target = $region114
        $region113: #{ncf_with_context.1} parent=109 // pred_region
          %s877 = sand.u32 %s238, 1
          %s878 = scalar_lea.sflag [#allocation6], %s877
          %s879 = sand.u32 %s238, 1
          %s880 = smul.addr %s879, 4
          %s881 = scalar_lea.vmem [#allocation5], %s880
          %883 = dma.done %s878, 64
        $region114: #{ncf_with_context.1} parent=109 // pred_fallthru
          _
      $region110: #{ncf_with_context.1} parent=5 // pred_fallthru
        _
    $region6: #{ncf_with_context.1} parent=1 // loop_footer
      %s24 = sadd.s32 1, %s20
    $region7: #{ncf_with_context.1} parent=1 // loop_footer_branch
      %19 = sbr.rel target = $region3
    $region8: #{ncf_with_context.1} parent=1 // loop_exit
      _
    %884 = vsyncpa [#allocation6], 1
    %s885 = scalar_lea.sflag [#allocation6], 1
    %886 = vsyncpa %s885, 1

</llo_original>
